<compile_context>
chip_gen: v5e
topology: v5e:2x2
jax: 0.10.0
libtpu: 0.0.40
codegen_flags: <defaults>
</compile_context>

<pallas_src>
import functools

import jax
import jax.numpy as jnp
from jax import lax
from jax.experimental import pallas as pl
from jax.experimental.pallas import tpu as pltpu

_IGNORE_INDEX = -100
_NEG = -3.0e38  # effectively -inf; representable in bf16 and f32


def _round_up(x, m):
    return ((x + m - 1) // m) * m


def _ce_tile_kernel(logits_ref, labels_ref, sum_ref, cnt_ref, *, num_classes):
    """One batch tile: partial sum of per-row CE losses + count of valid rows."""
    x = logits_ref[...]                       # (tile_n, c_pad), native dtype
    labels = labels_ref[...]                  # (tile_n, 1) int32
    tile_n, c_pad = x.shape

    col_ids = lax.broadcasted_iota(jnp.int32, (tile_n, c_pad), 1)
    col_valid = col_ids < num_classes

    # Mask padded class columns to -inf before the row max (keeps them out of logsumexp).
    neg = jnp.array(_NEG, dtype=x.dtype)
    xm = jnp.where(col_valid, x, neg)

    # max / shift in the native dtype (bf16 VPU on v6e/v7x); exp + accumulation in f32.
    row_max = jnp.max(xm, axis=-1, keepdims=True)                    # (tile_n, 1)
    shifted = (xm - row_max).astype(jnp.float32)
    sumexp = jnp.sum(jnp.exp(shifted), axis=-1, keepdims=True)
    lse = jnp.log(sumexp) + row_max.astype(jnp.float32)              # (tile_n, 1)

    # One-hot gather of the target logit: VPU compare/select, no lane gather, no MXU.
    tgt = jnp.sum(
        jnp.where(col_ids == labels, x, jnp.zeros_like(x)).astype(jnp.float32),
        axis=-1, keepdims=True)                                      # (tile_n, 1)

    # Valid rows = in-range labels. Padded tail rows carry _IGNORE_INDEX and drop out,
    # as do explicit ignore_index labels (torch F.cross_entropy default semantics).
    row_valid = jnp.logical_and(labels >= 0, labels < num_classes)   # (tile_n, 1)
    per_row = jnp.where(row_valid, lse - tgt, 0.0)

    loss_sum = jnp.sum(per_row)
    valid_cnt = jnp.sum(row_valid.astype(jnp.float32))

    # (1, 8, 128) partial slabs: satisfies (8, 128) tiling, unmasked stores, tiny HBM traffic.
    sum_ref[...] = jnp.full((1, 8, 128), loss_sum, jnp.float32)
    cnt_ref[...] = jnp.full((1, 8, 128), valid_cnt, jnp.float32)


def grapheme_ce(y_pred, grapheme_labels, tile_n=None):
    """Equivalent of GraphemeCE.forward(y_pred, {'grapheme': labels}) -> scalar mean CE."""
    n, c = y_pred.shape
    c_pad = _round_up(max(c, 128), 128)
    itemsize = jnp.dtype(y_pred.dtype).itemsize

    if tile_n is None:
        # Target ~2 MiB per logits tile (double-buffered -> ~4 MiB), safe on
        # v5e (16 MiB scoped), v6e/v7x (32 MiB scoped, 64 MiB physical on v7x),
        # while still >= hundreds of rows at typical class counts.
        budget = 2 * 1024 * 1024
        tile_n = max(8, min(1024, budget // (c_pad * itemsize)))
        tile_n = max(8, (tile_n // 8) * 8)
        tile_n = min(tile_n, _round_up(n, 8))
    assert tile_n % 8 == 0, "tile_n must be a multiple of 8 (sublane tiling)"

    num_tiles = pl.cdiv(n, tile_n)
    n_pad = num_tiles * tile_n

    # Pad batch (ignored rows) and class axis (masked columns).
    logits_p = jnp.pad(y_pred, ((0, n_pad - n), (0, c_pad - c)))
    labels_p = jnp.pad(
        grapheme_labels.astype(jnp.int32).reshape(n, 1),
        ((0, n_pad - n), (0, 0)),
        constant_values=_IGNORE_INDEX)

    kernel = functools.partial(_ce_tile_kernel, num_classes=c)

    # Rough VMEM request: double-buffered logits tile + f32 temporaries + slack.
    vmem_limit = int(min(48 * 2**20,
                         max(16 * 2**20, 8 * tile_n * c_pad * itemsize + (2 << 20))))

    grid_spec = pltpu.PrefetchScalarGridSpec(
        num_scalar_prefetch=0,
        grid=(num_tiles,),
        in_specs=[
            pl.BlockSpec((tile_n, c_pad), lambda i: (i, 0)),   # logits tile
            pl.BlockSpec((tile_n, 1), lambda i: (i, 0)),       # labels tile
        ],
        out_specs=(
            pl.BlockSpec((1, 8, 128), lambda i: (i, 0, 0)),    # per-tile loss sum
            pl.BlockSpec((1, 8, 128), lambda i: (i, 0, 0)),    # per-tile valid count
        ),
    )

    out_shape = (
        jax.ShapeDtypeStruct((num_tiles, 8, 128), jnp.float32),
        jax.ShapeDtypeStruct((num_tiles, 8, 128), jnp.float32),
    )

    partial_sums, partial_cnts = pl.pallas_call(
        kernel,
        grid_spec=grid_spec,
        out_shape=out_shape,
        compiler_params=pltpu.CompilerParams(
            dimension_semantics=("parallel",),   # independent per-tile partials -> megacore OK
            vmem_limit_bytes=vmem_limit,
        ),
    )(logits_p, labels_p)

    total = jnp.sum(partial_sums[:, 0, 0])
    count = jnp.sum(partial_cnts[:, 0, 0])
    return total / count


def _reference_ce(y_pred, labels, ignore_index=_IGNORE_INDEX):
    # Plain-JAX reference matching torch F.cross_entropy (mean reduction, ignore_index).
    logp = jax.nn.log_softmax(y_pred.astype(jnp.float32), axis=-1)
    labels = labels.astype(jnp.int32)
    valid = (labels != ignore_index) & (labels >= 0) & (labels < y_pred.shape[1])
    safe = jnp.where(valid, labels, 0)
    picked = jnp.take_along_axis(logp, safe[:, None], axis=-1)[:, 0]
    return -(jnp.sum(jnp.where(valid, picked, 0.0)) / jnp.sum(valid))


if __name__ == "__main__":
    key = jax.random.PRNGKey(0)
    k1, k2, k3, k4 = jax.random.split(key, 4)

    # Case 1: small grapheme head, single tile (batch=8, classes=32).
    N, C = 8, 32
    y_pred = jax.random.normal(k1, (N, C), dtype=jnp.float32)
    labels = jax.random.randint(k2, (N,), 0, C, dtype=jnp.int32)
    loss = jax.block_until_ready(grapheme_ce(y_pred, labels))
    ref = jax.block_until_ready(_reference_ce(y_pred, labels))
    assert jnp.allclose(loss, ref, atol=1e-5, rtol=1e-5), (loss, ref)

    # Case 2: multi-tile grid with ragged tail (37 rows, tile_n=16) + one ignored label.
    N2, C2 = 37, 168
    y2 = jax.random.normal(k3, (N2, C2), dtype=jnp.float32)
    l2 = jax.random.randint(k4, (N2,), 0, C2, dtype=jnp.int32)
    l2 = l2.at[5].set(_IGNORE_INDEX)
    loss2 = jax.block_until_ready(grapheme_ce(y2, l2, tile_n=16))
    ref2 = jax.block_until_ready(_reference_ce(y2, l2))
    assert jnp.allclose(loss2, ref2, atol=1e-5, rtol=1e-5), (loss2, ref2)

    print("KERNEL_OK")
</pallas_src>

<mosaic_0001>
module attributes {stable_mosaic.version = 11 : i64} {
  func.func @_ce_tile_kernel(%arg0: i32, %arg1: memref<8x128xf32, #tpu.memory_space<vmem>>, %arg2: memref<8x1xi32, #tpu.memory_space<vmem>>, %arg3: memref<1x8x128xf32, #tpu.memory_space<vmem>>, %arg4: memref<1x8x128xf32, #tpu.memory_space<vmem>>) attributes {dimension_semantics = [#tpu.dimension_semantics<parallel>], iteration_bounds = array<i64: 1>, scalar_prefetch = 0 : i64, scratch_operands = 0 : i64, tpu.core_type = #tpu.core_type<tc>, window_params = [{transform_indices = @transform_0, window_bounds = array<i64: 8, 128>}, {transform_indices = @transform_1, window_bounds = array<i64: 8, 1>}, {transform_indices = @transform_2, window_bounds = array<i64: 1, 8, 128>}, {transform_indices = @transform_3, window_bounds = array<i64: 1, 8, 128>}]} {
    %c0 = arith.constant 0 : index
    %c0_0 = arith.constant 0 : index
    %0 = vector.load %arg1[%c0, %c0_0] : memref<8x128xf32, #tpu.memory_space<vmem>>, vector<8x128xf32>
    %c0_1 = arith.constant 0 : index
    %c0_2 = arith.constant 0 : index
    %1 = vector.load %arg2[%c0_1, %c0_2] : memref<8x1xi32, #tpu.memory_space<vmem>>, vector<8x1xi32>
    %2 = tpu.iota {dimensions = array<i32: 1>} : vector<8x128xi32>
    %c32_i32 = arith.constant 32 : i32
    %3 = vector.broadcast %c32_i32 : i32 to vector<8x128xi32>
    %4 = arith.cmpi slt, %2, %3 : vector<8x128xi32>
    %cst = arith.constant -3.000000e+38 : f32
    %5 = vector.broadcast %cst : f32 to vector<8x128xf32>
    %6 = arith.select %4, %0, %5 : vector<8x128xi1>, vector<8x128xf32>
    %cst_3 = arith.constant dense<0xFF800000> : vector<8xf32>
    %7 = vector.multi_reduction <maximumf>, %6, %cst_3 [1] : vector<8x128xf32> to vector<8xf32>
    %8 = vector.shape_cast %7 : vector<8xf32> to vector<8x1xf32>
    %9 = vector.broadcast %8 : vector<8x1xf32> to vector<8x128xf32>
    %10 = arith.subf %6, %9 : vector<8x128xf32>
    %11 = math.exp %10 : vector<8x128xf32>
    %cst_4 = arith.constant dense<0.000000e+00> : vector<8xf32>
    %12 = vector.multi_reduction <add>, %11, %cst_4 [1] : vector<8x128xf32> to vector<8xf32>
    %13 = vector.shape_cast %12 : vector<8xf32> to vector<8x1xf32>
    %14 = math.log %13 : vector<8x1xf32>
    %15 = arith.addf %14, %8 : vector<8x1xf32>
    %16 = vector.broadcast %1 : vector<8x1xi32> to vector<8x128xi32>
    %17 = arith.cmpi eq, %2, %16 : vector<8x128xi32>
    %cst_5 = arith.constant 0.000000e+00 : f32
    %18 = vector.broadcast %cst_5 : f32 to vector<8x128xf32>
    %19 = arith.select %17, %0, %18 : vector<8x128xi1>, vector<8x128xf32>
    %cst_6 = arith.constant dense<0.000000e+00> : vector<8xf32>
    %20 = vector.multi_reduction <add>, %19, %cst_6 [1] : vector<8x128xf32> to vector<8xf32>
    %21 = vector.shape_cast %20 : vector<8xf32> to vector<8x1xf32>
    %c0_i32 = arith.constant 0 : i32
    %22 = vector.broadcast %c0_i32 : i32 to vector<8x1xi32>
    %23 = arith.cmpi sge, %1, %22 : vector<8x1xi32>
    %c32_i32_7 = arith.constant 32 : i32
    %24 = vector.broadcast %c32_i32_7 : i32 to vector<8x1xi32>
    %25 = arith.cmpi slt, %1, %24 : vector<8x1xi32>
    %26 = arith.andi %23, %25 : vector<8x1xi1>
    %27 = arith.subf %15, %21 : vector<8x1xf32>
    %cst_8 = arith.constant 0.000000e+00 : f32
    %28 = vector.broadcast %cst_8 : f32 to vector<8x1xf32>
    %29 = arith.select %26, %27, %28 : vector<8x1xi1>, vector<8x1xf32>
    %30 = vector.shape_cast %29 : vector<8x1xf32> to vector<1x8x1xf32>
    %cst_9 = arith.constant dense<0.000000e+00> : vector<1xf32>
    %31 = vector.multi_reduction <add>, %30, %cst_9 [1, 2] : vector<1x8x1xf32> to vector<1xf32>
    %32 = vector.shape_cast %31 : vector<1xf32> to vector<1x1x1xf32>
    %33 = vector.extract %32[0, 0, 0] : f32 from vector<1x1x1xf32>
    %34 = arith.extui %26 : vector<8x1xi1> to vector<8x1xi32>
    %35 = arith.sitofp %34 : vector<8x1xi32> to vector<8x1xf32>
    %36 = vector.shape_cast %35 : vector<8x1xf32> to vector<1x8x1xf32>
    %cst_10 = arith.constant dense<0.000000e+00> : vector<1xf32>
    %37 = vector.multi_reduction <add>, %36, %cst_10 [1, 2] : vector<1x8x1xf32> to vector<1xf32>
    %38 = vector.shape_cast %37 : vector<1xf32> to vector<1x1x1xf32>
    %39 = vector.extract %38[0, 0, 0] : f32 from vector<1x1x1xf32>
    %40 = vector.broadcast %33 : f32 to vector<1x8x128xf32>
    %c0_11 = arith.constant 0 : index
    %c0_12 = arith.constant 0 : index
    %c0_13 = arith.constant 0 : index
    %41 = vector.load %arg3[%c0_11, %c0_12, %c0_13] : memref<1x8x128xf32, #tpu.memory_space<vmem>>, vector<1x8x128xf32>
    tpu.vector_store %arg3[%c0_11, %c0_12, %c0_13], %40 {strides = array<i32>} : memref<1x8x128xf32, #tpu.memory_space<vmem>>, vector<1x8x128xf32>,
    %42 = vector.broadcast %39 : f32 to vector<1x8x128xf32>
    %c0_14 = arith.constant 0 : index
    %c0_15 = arith.constant 0 : index
    %c0_16 = arith.constant 0 : index
    %43 = vector.load %arg4[%c0_14, %c0_15, %c0_16] : memref<1x8x128xf32, #tpu.memory_space<vmem>>, vector<1x8x128xf32>
    tpu.vector_store %arg4[%c0_14, %c0_15, %c0_16], %42 {strides = array<i32>} : memref<1x8x128xf32, #tpu.memory_space<vmem>>, vector<1x8x128xf32>,
    return
  }
  func.func @transform_0(%arg0: i32) -> (i32, i32) {
    %c0_i32 = arith.constant 0 : i32
    %c0_i32_0 = arith.constant 0 : i32
    return %arg0, %c0_i32 : i32, i32
  }
  func.func @transform_1(%arg0: i32) -> (i32, i32) {
    %c0_i32 = arith.constant 0 : i32
    %c0_i32_0 = arith.constant 0 : i32
    return %arg0, %c0_i32 : i32, i32
  }
  func.func @transform_2(%arg0: i32) -> (i32, i32, i32) {
    %c0_i32 = arith.constant 0 : i32
    %c0_i32_0 = arith.constant 0 : i32
    %c0_i32_1 = arith.constant 0 : i32
    return %arg0, %c0_i32, %c0_i32_0 : i32, i32, i32
  }
  func.func @transform_3(%arg0: i32) -> (i32, i32, i32) {
    %c0_i32 = arith.constant 0 : i32
    %c0_i32_0 = arith.constant 0 : i32
    %c0_i32_1 = arith.constant 0 : i32
    return %arg0, %c0_i32, %c0_i32_0 : i32, i32, i32
  }
}

</mosaic_0001>

<llo_original>
// kernel: tpu_custom_call.1
$region0: #{tpu_custom_call.1}
  #allocation0 [shape = 'u32[]', space=smem, size = 0x4, offset = 0x4, fixed_abs, tag = 'smem constant byte address 0x4 - core index']
  #allocation1 [shape = 'u32[72,128]{1,0:T(1,128)}', space=vmem, size = 0x9000, scoped, tag = 'internal scratch']
  %s0 = inlined_call_operand.vmem [shape: f32[8,128], index: 0, kind: input, shape index: {}]
  %s1 = inlined_call_operand.vmem [shape: s32[8,1], index: 1, kind: input, shape index: {}]
  %s2 = inlined_call_operand.hbm [shape: f32[1,8,128], index: 2, kind: output, shape index: {0}]
  %s3 = inlined_call_operand.hbm [shape: f32[1,8,128], index: 3, kind: output, shape index: {1}]
  %4 = xla_tuple %s2, %s3
  %s5 = sld [smem:[#allocation0]]
  $region26: #{tpu_custom_call.1} parent=0
    _
  %s7 = ssub.s32 1, %s5
  %s8 = scalar_select 0, %s7, %s5
  $region1: #{tpu_custom_call.1} parent=0
    #allocation2 [shape = 'u8[4096]{0}', space=vmem, size = 0x1000, scoped, tag = 'output window, operand 0, single buffered']
    #allocation3 [shape = 's32[1]{0}', space=sflag, size = 0x4, scoped, tag = 'scoped memory for tpu_custom_call.1']
    #allocation4 [shape = 'u8[4096]{0}', space=vmem, size = 0x1000, scoped, tag = 'output window, operand 1, single buffered']
    #allocation5 [shape = 's32[1]{0}', space=sflag, size = 0x4, scoped, tag = 'scoped memory for tpu_custom_call.1']
    %9 = vsyncpa [#allocation3], 0
    %10 = vsyncpa [#allocation5], 0
    // Predicated region
    $region2: #{tpu_custom_call.1} parent=1 // pred_check
      _
    $region3: #{tpu_custom_call.1} parent=1 // pred_check_branch
      %12 = sbr.rel (0) target = $region5
    $region4: #{tpu_custom_call.1} parent=1 // pred_region
      _
    $region5: #{tpu_custom_call.1} parent=1 // pred_fallthru
      _
    // Predicated region
    $region6: #{tpu_custom_call.1} parent=1 // pred_check
      _
    $region7: #{tpu_custom_call.1} parent=1 // pred_check_branch
      %14 = sbr.rel (0) target = $region9
    $region8: #{tpu_custom_call.1} parent=1 // pred_region
      _
    $region9: #{tpu_custom_call.1} parent=1 // pred_fallthru
      _
    %v15 = vld [vmem:[%s0] sm:$0xff]
    %v16 = vld [vmem:[%s1] sm:$0xff]
    %v17 = vlaneseq
    %v18 = vand.u32 %v17, 127
    %vm19 = vcmp.lt.s32.totalorder %v18, 32
    %v20 = vsel %vm19, %v15, -3e+38
    %21 = vmax.xlane.f32.xlu0 %v20
    %v22 = vpop.xlane.xlu0 %21
    %v23 = vsub.f32 %v20, %v22
    %v24 = vmul.f32 %v23, 1.442695
    %v25 = vpow.pop %v24
    %26 = vadd.xlane.f32.xlu0 %v25
    %v27 = vpop.xlane.xlu0 %26
    %v28 = vlog2.pop %v27
    %v29 = vmul.f32 %v28, 0.6931472
    %v30 = vadd.f32 %v29, %v22
    %31 = vset.pattern.permute.xlu0 0
    %32 = vperm.xlu0 %31, %v16
    %v33 = vpop.permute.xlu0 %32
    %vm34 = vcmp.eq.s32.totalorder %v18, %v33
    %v35 = vsel %vm34, %v15, 0.0
    %36 = vadd.xlane.f32.xlu0 %v35
    %v37 = vpop.xlane.xlu0 %36
    %vm38 = vcmp.ge.s32.totalorder %v16, 0
    %vm39 = vcmp.lt.s32.totalorder %v16, 32
    %vm40 = vmand %vm38, %vm39
    %v41 = vsub.f32 %v30, %v37
    %v42 = vsel %vm40, %v41, 0.0
    %vm43 = vcmask 7168
    %v44 = vsel %vm43, %v42, 0.0
    %45 = vadd.xlane.f32.xlu0 %v44
    %v46 = vpop.xlane.xlu0 %45
    %v47 = vrot.slane %v46, 4
    %v48 = vadd.f32 %v46, %v47
    %v49 = vrot.slane %v48, 2
    %v50 = vadd.f32 %v48, %v49
    %v51 = vrot.slane %v50, 1
    %v52 = vadd.f32 %v50, %v51
    %s53 = vtos %v52
    %v54 = vsel %vm40, 1, 0
    %v55 = vcvt.s32.f32 %v54
    %v56 = vsel %vm43, %v55, 0.0
    %57 = vadd.xlane.f32.xlu0 %v56
    %v58 = vpop.xlane.xlu0 %57
    %v59 = vrot.slane %v58, 4
    %v60 = vadd.f32 %v58, %v59
    %v61 = vrot.slane %v60, 2
    %v62 = vadd.f32 %v60, %v61
    %v63 = vrot.slane %v62, 1
    %v64 = vadd.f32 %v62, %v63
    %s65 = vtos %v64
    %v66 = vstv %s53
    %67 = vst [vmem:[#allocation2] sm:$0xff] %v66
    %v68 = vstv %s65
    %69 = vst [vmem:[#allocation4] sm:$0xff] %v68
    // Predicated region
    $region10: #{tpu_custom_call.1} parent=1 // pred_check
      _
    $region11: #{tpu_custom_call.1} parent=1 // pred_check_branch
      %71 = sbr.rel (0) target = $region13
    $region12: #{tpu_custom_call.1} parent=1 // pred_region
      %73 = vsyncadd [#allocation3], 0
      %s75 = sshll.u32 [#allocation2], 4
      %s76 = int_to_ptr.vmem [resolvable:$true] %s75
      %s77 = sshll.u32 %s2, 4
      %s78 = int_to_ptr.hbm [resolvable:$true] %s77
      %80 = dma.vmem_to_hbm [thread:$0]  %s76, 128, %s78, [#allocation3]
    $region13: #{tpu_custom_call.1} parent=1 // pred_fallthru
      _
    // Predicated region
    $region14: #{tpu_custom_call.1} parent=1 // pred_check
      _
    $region15: #{tpu_custom_call.1} parent=1 // pred_check_branch
      %82 = sbr.rel (0) target = $region17
    $region16: #{tpu_custom_call.1} parent=1 // pred_region
      %84 = vsyncadd [#allocation5], 0
      %s86 = sshll.u32 [#allocation4], 4
      %s87 = int_to_ptr.vmem [resolvable:$true] %s86
      %s88 = sshll.u32 %s3, 4
      %s89 = int_to_ptr.hbm [resolvable:$true] %s88
      %91 = dma.vmem_to_hbm [thread:$0]  %s87, 128, %s89, [#allocation5]
    $region17: #{tpu_custom_call.1} parent=1 // pred_fallthru
      _
    // Predicated region
    $region18: #{tpu_custom_call.1} parent=1 // pred_check
      _
    $region19: #{tpu_custom_call.1} parent=1 // pred_check_branch
      %93 = sbr.rel (0) target = $region21
    $region20: #{tpu_custom_call.1} parent=1 // pred_region
      %95 = dma.done [#allocation3], 128
    $region21: #{tpu_custom_call.1} parent=1 // pred_fallthru
      _
    // Predicated region
    $region22: #{tpu_custom_call.1} parent=1 // pred_check
      _
    $region23: #{tpu_custom_call.1} parent=1 // pred_check_branch
      %97 = sbr.rel (0) target = $region25
    $region24: #{tpu_custom_call.1} parent=1 // pred_region
      %99 = dma.done [#allocation5], 128
    $region25: #{tpu_custom_call.1} parent=1 // pred_fallthru
      _
    %100 = vsyncpa [#allocation3], 1
    %101 = vsyncpa [#allocation5], 1

</llo_original>
